<compile_context>
chip_gen: v5e
topology: v5e:2x2
jax: 0.10.0
libtpu: 0.0.40
codegen_flags: <defaults>
</compile_context>

<pallas_src>
import functools

import jax
import jax.numpy as jnp
from jax.experimental import pallas as pl
from jax.experimental.pallas import tpu as pltpu


def mini_deepsets_kernel(x_ref, pool_ref, w1_ref, b1_ref, w2_ref, b2_ref,
                         w3_ref, b3_ref, wo_ref, bo_ref, o_ref):
    # x_ref block: (TB*n, d) — TB sets flattened along the row axis.
    x = x_ref[...]

    # fc1 / fc2 / fc3 + ReLU on the full (TB*n, ·) matrix.
    h = jnp.dot(x, w1_ref[...], preferred_element_type=jnp.float32) + b1_ref[...]
    h = jnp.maximum(h, 0.0)
    h = jnp.dot(h, w2_ref[...], preferred_element_type=jnp.float32) + b2_ref[...]
    h = jnp.maximum(h, 0.0)
    h = jnp.dot(h, w3_ref[...], preferred_element_type=jnp.float32) + b3_ref[...]
    h = jnp.maximum(h, 0.0)

    # Permutation-invariant sum over each set of n rows, done as an MXU matmul
    # with a block-diagonal ones matrix (TB, TB*n) -> (TB, hid).  This keeps
    # the reduction off the VALU/XLU and avoids any 3-D reshape/relayout.
    pooled = jnp.dot(pool_ref[...], h, preferred_element_type=jnp.float32)

    # fc_out -> (TB, out_dim) tile of the (B, out_dim) output.
    o_ref[...] = (jnp.dot(pooled, wo_ref[...],
                          preferred_element_type=jnp.float32) + bo_ref[...])


@functools.partial(jax.jit, static_argnames=("tb",))
def mini_deepsets_forward(x, params, tb=128):
    B, n, d = x.shape
    hid = params["w1"].shape[1]
    out_dim = params["wo"].shape[1]

    # Batch-tile size: TB sets per grid step (M = TB*n MXU rows per matmul).
    TB = min(tb, B)
    n_tiles = pl.cdiv(B, TB)
    B_pad = n_tiles * TB

    # Flatten sets onto the row axis; pad the batch to a multiple of TB.
    # Padded rows only affect padded output rows (sliced off below).
    x_flat = x.reshape(B * n, d)
    if B_pad != B:
        x_flat = jnp.pad(x_flat, ((0, (B_pad - B) * n), (0, 0)))

    # Block-diagonal pooling matrix: pool[i, j] = 1 iff row j belongs to set i
    # within the current tile of TB sets.
    pool = (jnp.arange(TB * n)[None, :] // n
            == jnp.arange(TB)[:, None]).astype(jnp.float32)

    grid_spec = pltpu.PrefetchScalarGridSpec(
        num_scalar_prefetch=0,
        grid=(n_tiles,),
        in_specs=[
            pl.BlockSpec((TB * n, d), lambda b: (b, 0)),        # x (flattened)
            pl.BlockSpec((TB, TB * n), lambda b: (0, 0)),       # pooling matrix
            pl.BlockSpec((d, hid), lambda b: (0, 0)),           # w1
            pl.BlockSpec((1, hid), lambda b: (0, 0)),           # b1
            pl.BlockSpec((hid, hid), lambda b: (0, 0)),         # w2
            pl.BlockSpec((1, hid), lambda b: (0, 0)),           # b2
            pl.BlockSpec((hid, hid), lambda b: (0, 0)),         # w3
            pl.BlockSpec((1, hid), lambda b: (0, 0)),           # b3
            pl.BlockSpec((hid, out_dim), lambda b: (0, 0)),     # w_out
            pl.BlockSpec((1, out_dim), lambda b: (0, 0)),       # b_out
        ],
        out_specs=pl.BlockSpec((TB, out_dim), lambda b: (b, 0)),
    )

    out = pl.pallas_call(
        mini_deepsets_kernel,
        out_shape=jax.ShapeDtypeStruct((B_pad, out_dim), jnp.float32),
        grid_spec=grid_spec,
        compiler_params=pltpu.CompilerParams(
            dimension_semantics=("parallel",)),
    )(x_flat, pool, params["w1"], params["b1"], params["w2"], params["b2"],
      params["w3"], params["b3"], params["wo"], params["bo"])

    return out[:B]                                              # (B, out_dim)


def init_params(key, in_dim, hid_dim, out_dim):
    """Deterministic init mimicking torch.nn.Linear's default U(-1/sqrt(fan_in), +)."""
    def linear(k, fan_in, fan_out):
        kw, kb = jax.random.split(k)
        lim = 1.0 / jnp.sqrt(fan_in)
        # weight stored pre-transposed: (in_features, out_features)
        w = jax.random.uniform(kw, (fan_in, fan_out), jnp.float32, -lim, lim)
        b = jax.random.uniform(kb, (1, fan_out), jnp.float32, -lim, lim)
        return w, b

    k1, k2, k3, k4 = jax.random.split(key, 4)
    w1, b1 = linear(k1, in_dim, hid_dim)
    w2, b2 = linear(k2, hid_dim, hid_dim)
    w3, b3 = linear(k3, hid_dim, hid_dim)
    wo, bo = linear(k4, hid_dim, out_dim)
    return {"w1": w1, "b1": b1, "w2": w2, "b2": b2,
            "w3": w3, "b3": b3, "wo": wo, "bo": bo}


def reference_forward(x, p):
    h = jnp.maximum(x @ p["w1"] + p["b1"], 0.0)
    h = jnp.maximum(h @ p["w2"] + p["b2"], 0.0)
    h = jnp.maximum(h @ p["w3"] + p["b3"], 0.0)
    pooled = h.sum(axis=1)
    return pooled @ p["wo"] + p["bo"]


if __name__ == "__main__":
    n, in_dim, hid_dim, out_dim = 8, 4, 32, 8
    key = jax.random.PRNGKey(0)
    kx, kp, kx2 = jax.random.split(key, 3)
    params = init_params(kp, in_dim, hid_dim, out_dim)

    # Small case (single tile, block == full array).
    B = 2
    x = jax.random.normal(kx, (B, n, in_dim), dtype=jnp.float32)
    out = jax.block_until_ready(mini_deepsets_forward(x, params))
    ref = reference_forward(x, params)
    assert out.shape == (B, out_dim)
    assert jnp.allclose(out, ref, atol=1e-4, rtol=1e-4), "mismatch vs reference (small)"

    # Larger case exercising the batched grid (multiple tiles) + tail padding.
    B2 = 200  # not a multiple of TB=128 -> padded to 256, 2 grid steps
    x2 = jax.random.normal(kx2, (B2, n, in_dim), dtype=jnp.float32)
    out2 = jax.block_until_ready(mini_deepsets_forward(x2, params))
    ref2 = reference_forward(x2, params)
    assert out2.shape == (B2, out_dim)
    assert jnp.allclose(out2, ref2, atol=1e-4, rtol=1e-4), "mismatch vs reference (batched)"

    print("KERNEL_OK")
</pallas_src>

<mosaic_0001>
module attributes {stable_mosaic.version = 11 : i64} {
  func.func @mini_deepsets_kernel(%arg0: i32, %arg1: memref<16x4xf32, #tpu.memory_space<vmem>>, %arg2: memref<2x16xf32, #tpu.memory_space<vmem>>, %arg3: memref<4x32xf32, #tpu.memory_space<vmem>>, %arg4: memref<1x32xf32, #tpu.memory_space<vmem>>, %arg5: memref<32x32xf32, #tpu.memory_space<vmem>>, %arg6: memref<1x32xf32, #tpu.memory_space<vmem>>, %arg7: memref<32x32xf32, #tpu.memory_space<vmem>>, %arg8: memref<1x32xf32, #tpu.memory_space<vmem>>, %arg9: memref<32x8xf32, #tpu.memory_space<vmem>>, %arg10: memref<1x8xf32, #tpu.memory_space<vmem>>, %arg11: memref<2x8xf32, #tpu.memory_space<vmem>>) attributes {dimension_semantics = [#tpu.dimension_semantics<parallel>], iteration_bounds = array<i64: 1>, scalar_prefetch = 0 : i64, scratch_operands = 0 : i64, tpu.core_type = #tpu.core_type<tc>, window_params = [{transform_indices = @transform_0, window_bounds = array<i64: 16, 4>}, {pipeline_mode = #tpu.pipeline_mode<synchronous>, transform_indices = @transform_1, window_bounds = array<i64: 2, 16>}, {pipeline_mode = #tpu.pipeline_mode<synchronous>, transform_indices = @transform_2, window_bounds = array<i64: 4, 32>}, {pipeline_mode = #tpu.pipeline_mode<synchronous>, transform_indices = @transform_3, window_bounds = array<i64: 1, 32>}, {pipeline_mode = #tpu.pipeline_mode<synchronous>, transform_indices = @transform_4, window_bounds = array<i64: 32, 32>}, {pipeline_mode = #tpu.pipeline_mode<synchronous>, transform_indices = @transform_5, window_bounds = array<i64: 1, 32>}, {pipeline_mode = #tpu.pipeline_mode<synchronous>, transform_indices = @transform_6, window_bounds = array<i64: 32, 32>}, {pipeline_mode = #tpu.pipeline_mode<synchronous>, transform_indices = @transform_7, window_bounds = array<i64: 1, 32>}, {pipeline_mode = #tpu.pipeline_mode<synchronous>, transform_indices = @transform_8, window_bounds = array<i64: 32, 8>}, {pipeline_mode = #tpu.pipeline_mode<synchronous>, transform_indices = @transform_9, window_bounds = array<i64: 1, 8>}, {transform_indices = @transform_10, window_bounds = array<i64: 2, 8>}]} {
    %c0 = arith.constant 0 : index
    %c0_0 = arith.constant 0 : index
    %0 = vector.load %arg1[%c0, %c0_0] : memref<16x4xf32, #tpu.memory_space<vmem>>, vector<16x4xf32>
    %c0_1 = arith.constant 0 : index
    %c0_2 = arith.constant 0 : index
    %1 = vector.load %arg3[%c0_1, %c0_2] : memref<4x32xf32, #tpu.memory_space<vmem>>, vector<4x32xf32>
    %cst = arith.constant dense<0.000000e+00> : vector<16x32xf32>
    %2 = tpu.matmul %0, %1, %cst {dimension_numbers = #tpu.dot_dimension_numbers<[1], [0], [0], [1], [0, 0, 1, 1], [], []>} : vector<16x4xf32>, vector<4x32xf32>, vector<16x32xf32> -> vector<16x32xf32>
    %c0_3 = arith.constant 0 : index
    %c0_4 = arith.constant 0 : index
    %3 = vector.load %arg4[%c0_3, %c0_4] : memref<1x32xf32, #tpu.memory_space<vmem>>, vector<1x32xf32>
    %4 = vector.broadcast %3 : vector<1x32xf32> to vector<16x32xf32>
    %5 = arith.addf %2, %4 : vector<16x32xf32>
    %cst_5 = arith.constant 0.000000e+00 : f32
    %6 = vector.broadcast %cst_5 : f32 to vector<16x32xf32>
    %7 = arith.maximumf %5, %6 : vector<16x32xf32>
    %c0_6 = arith.constant 0 : index
    %c0_7 = arith.constant 0 : index
    %8 = vector.load %arg5[%c0_6, %c0_7] : memref<32x32xf32, #tpu.memory_space<vmem>>, vector<32x32xf32>
    %cst_8 = arith.constant dense<0.000000e+00> : vector<16x32xf32>
    %9 = tpu.matmul %7, %8, %cst_8 {dimension_numbers = #tpu.dot_dimension_numbers<[1], [0], [0], [1], [0, 0, 1, 1], [], []>} : vector<16x32xf32>, vector<32x32xf32>, vector<16x32xf32> -> vector<16x32xf32>
    %c0_9 = arith.constant 0 : index
    %c0_10 = arith.constant 0 : index
    %10 = vector.load %arg6[%c0_9, %c0_10] : memref<1x32xf32, #tpu.memory_space<vmem>>, vector<1x32xf32>
    %11 = vector.broadcast %10 : vector<1x32xf32> to vector<16x32xf32>
    %12 = arith.addf %9, %11 : vector<16x32xf32>
    %cst_11 = arith.constant 0.000000e+00 : f32
    %13 = vector.broadcast %cst_11 : f32 to vector<16x32xf32>
    %14 = arith.maximumf %12, %13 : vector<16x32xf32>
    %c0_12 = arith.constant 0 : index
    %c0_13 = arith.constant 0 : index
    %15 = vector.load %arg7[%c0_12, %c0_13] : memref<32x32xf32, #tpu.memory_space<vmem>>, vector<32x32xf32>
    %cst_14 = arith.constant dense<0.000000e+00> : vector<16x32xf32>
    %16 = tpu.matmul %14, %15, %cst_14 {dimension_numbers = #tpu.dot_dimension_numbers<[1], [0], [0], [1], [0, 0, 1, 1], [], []>} : vector<16x32xf32>, vector<32x32xf32>, vector<16x32xf32> -> vector<16x32xf32>
    %c0_15 = arith.constant 0 : index
    %c0_16 = arith.constant 0 : index
    %17 = vector.load %arg8[%c0_15, %c0_16] : memref<1x32xf32, #tpu.memory_space<vmem>>, vector<1x32xf32>
    %18 = vector.broadcast %17 : vector<1x32xf32> to vector<16x32xf32>
    %19 = arith.addf %16, %18 : vector<16x32xf32>
    %cst_17 = arith.constant 0.000000e+00 : f32
    %20 = vector.broadcast %cst_17 : f32 to vector<16x32xf32>
    %21 = arith.maximumf %19, %20 : vector<16x32xf32>
    %c0_18 = arith.constant 0 : index
    %c0_19 = arith.constant 0 : index
    %22 = vector.load %arg2[%c0_18, %c0_19] : memref<2x16xf32, #tpu.memory_space<vmem>>, vector<2x16xf32>
    %cst_20 = arith.constant dense<0.000000e+00> : vector<2x32xf32>
    %23 = tpu.matmul %22, %21, %cst_20 {dimension_numbers = #tpu.dot_dimension_numbers<[1], [0], [0], [1], [0, 0, 1, 1], [], []>} : vector<2x16xf32>, vector<16x32xf32>, vector<2x32xf32> -> vector<2x32xf32>
    %c0_21 = arith.constant 0 : index
    %c0_22 = arith.constant 0 : index
    %24 = vector.load %arg9[%c0_21, %c0_22] : memref<32x8xf32, #tpu.memory_space<vmem>>, vector<32x8xf32>
    %cst_23 = arith.constant dense<0.000000e+00> : vector<2x8xf32>
    %25 = tpu.matmul %23, %24, %cst_23 {dimension_numbers = #tpu.dot_dimension_numbers<[1], [0], [0], [1], [0, 0, 1, 1], [], []>} : vector<2x32xf32>, vector<32x8xf32>, vector<2x8xf32> -> vector<2x8xf32>
    %c0_24 = arith.constant 0 : index
    %c0_25 = arith.constant 0 : index
    %26 = vector.load %arg10[%c0_24, %c0_25] : memref<1x8xf32, #tpu.memory_space<vmem>>, vector<1x8xf32>
    %27 = vector.broadcast %26 : vector<1x8xf32> to vector<2x8xf32>
    %28 = arith.addf %25, %27 : vector<2x8xf32>
    %c0_26 = arith.constant 0 : index
    %c0_27 = arith.constant 0 : index
    %29 = vector.load %arg11[%c0_26, %c0_27] : memref<2x8xf32, #tpu.memory_space<vmem>>, vector<2x8xf32>
    tpu.vector_store %arg11[%c0_26, %c0_27], %28 {strides = array<i32>} : memref<2x8xf32, #tpu.memory_space<vmem>>, vector<2x8xf32>,
    return
  }
  func.func @transform_0(%arg0: i32) -> (i32, i32) {
    %c0_i32 = arith.constant 0 : i32
    %c0_i32_0 = arith.constant 0 : i32
    return %arg0, %c0_i32 : i32, i32
  }
  func.func @transform_1(%arg0: i32) -> (i32, i32) {
    %c0_i32 = arith.constant 0 : i32
    %c0_i32_0 = arith.constant 0 : i32
    %c0_i32_1 = arith.constant 0 : i32
    return %c0_i32, %c0_i32_0 : i32, i32
  }
  func.func @transform_2(%arg0: i32) -> (i32, i32) {
    %c0_i32 = arith.constant 0 : i32
    %c0_i32_0 = arith.constant 0 : i32
    %c0_i32_1 = arith.constant 0 : i32
    return %c0_i32, %c0_i32_0 : i32, i32
  }
  func.func @transform_3(%arg0: i32) -> (i32, i32) {
    %c0_i32 = arith.constant 0 : i32
    %c0_i32_0 = arith.constant 0 : i32
    %c0_i32_1 = arith.constant 0 : i32
    return %c0_i32, %c0_i32_0 : i32, i32
  }
  func.func @transform_4(%arg0: i32) -> (i32, i32) {
    %c0_i32 = arith.constant 0 : i32
    %c0_i32_0 = arith.constant 0 : i32
    %c0_i32_1 = arith.constant 0 : i32
    return %c0_i32, %c0_i32_0 : i32, i32
  }
  func.func @transform_5(%arg0: i32) -> (i32, i32) {
    %c0_i32 = arith.constant 0 : i32
    %c0_i32_0 = arith.constant 0 : i32
    %c0_i32_1 = arith.constant 0 : i32
    return %c0_i32, %c0_i32_0 : i32, i32
  }
  func.func @transform_6(%arg0: i32) -> (i32, i32) {
    %c0_i32 = arith.constant 0 : i32
    %c0_i32_0 = arith.constant 0 : i32
    %c0_i32_1 = arith.constant 0 : i32
    return %c0_i32, %c0_i32_0 : i32, i32
  }
  func.func @transform_7(%arg0: i32) -> (i32, i32) {
    %c0_i32 = arith.constant 0 : i32
    %c0_i32_0 = arith.constant 0 : i32
    %c0_i32_1 = arith.constant 0 : i32
    return %c0_i32, %c0_i32_0 : i32, i32
  }
  func.func @transform_8(%arg0: i32) -> (i32, i32) {
    %c0_i32 = arith.constant 0 : i32
    %c0_i32_0 = arith.constant 0 : i32
    %c0_i32_1 = arith.constant 0 : i32
    return %c0_i32, %c0_i32_0 : i32, i32
  }
  func.func @transform_9(%arg0: i32) -> (i32, i32) {
    %c0_i32 = arith.constant 0 : i32
    %c0_i32_0 = arith.constant 0 : i32
    %c0_i32_1 = arith.constant 0 : i32
    return %c0_i32, %c0_i32_0 : i32, i32
  }
  func.func @transform_10(%arg0: i32) -> (i32, i32) {
    %c0_i32 = arith.constant 0 : i32
    %c0_i32_0 = arith.constant 0 : i32
    return %arg0, %c0_i32 : i32, i32
  }
}

</mosaic_0001>

<llo_original>
// kernel: mini_deepsets_forward.1
$region0: #{mini_deepsets_forward.1}
  #allocation0 [shape = 'u32[]', space=smem, size = 0x4, offset = 0x4, fixed_abs, tag = 'smem constant byte address 0x4 - core index']
  #allocation1 [shape = 'u32[72,128]{1,0:T(1,128)}', space=vmem, size = 0x9000, scoped, tag = 'internal scratch']
  %s0 = inlined_call_operand.vmem [shape: f32[16,4], index: 0, kind: input, shape index: {}]
  %s1 = inlined_call_operand.vmem [shape: f32[2,16], index: 1, kind: input, shape index: {}]
  %s2 = inlined_call_operand.vmem [shape: f32[4,32], index: 2, kind: input, shape index: {}]
  %s3 = inlined_call_operand.vmem [shape: f32[1,32], index: 3, kind: input, shape index: {}]
  %s4 = inlined_call_operand.vmem [shape: f32[32,32], index: 4, kind: input, shape index: {}]
  %s5 = inlined_call_operand.vmem [shape: f32[1,32], index: 5, kind: input, shape index: {}]
  %s6 = inlined_call_operand.hbm [shape: f32[32,32], index: 6, kind: input, shape index: {}]
  %s7 = inlined_call_operand.vmem [shape: f32[1,32], index: 7, kind: input, shape index: {}]
  %s8 = inlined_call_operand.vmem [shape: f32[32,8], index: 8, kind: input, shape index: {}]
  %s9 = inlined_call_operand.vmem [shape: f32[1,8], index: 9, kind: input, shape index: {}]
  %s10 = inlined_call_operand.hbm [shape: f32[2,8], index: 10, kind: output, shape index: {}]
  %s11 = sld [smem:[#allocation0]]
  $region54: #{mini_deepsets_forward.1} parent=0
    _
  %s13 = ssub.s32 1, %s11
  %s14 = scalar_select 0, %s13, %s11
  $region1: #{mini_deepsets_forward.1} parent=0
    #allocation2 [shape = 'u8[16384]{0}', space=vmem, size = 0x4000, scoped, tag = 'input window, operand 6, single buffered']
    #allocation3 [shape = 's32[1]{0}', space=sflag, size = 0x4, scoped, tag = 'scoped memory for mini_deepsets_forward.1']
    #allocation4 [shape = 's32[1]{0}', space=sflag, size = 0x4, scoped, tag = 'scoped memory for mini_deepsets_forward.1']
    #allocation5 [shape = 'u8[1024]{0}', space=vmem, size = 0x400, scoped, tag = 'output window, operand 0, single buffered']
    %15 = vsyncpa [#allocation3], 0
    %16 = vsyncpa [#allocation4], 0
    // Predicated region
    $region2: #{mini_deepsets_forward.1} parent=1 // pred_check
      _
    $region3: #{mini_deepsets_forward.1} parent=1 // pred_check_branch
      %18 = sbr.rel (0) target = $region5
    $region4: #{mini_deepsets_forward.1} parent=1 // pred_region
      _
    $region5: #{mini_deepsets_forward.1} parent=1 // pred_fallthru
      _
    // Predicated region
    $region6: #{mini_deepsets_forward.1} parent=1 // pred_check
      _
    $region7: #{mini_deepsets_forward.1} parent=1 // pred_check_branch
      %20 = sbr.rel (0) target = $region9
    $region8: #{mini_deepsets_forward.1} parent=1 // pred_region
      _
    $region9: #{mini_deepsets_forward.1} parent=1 // pred_fallthru
      _
    // Predicated region
    $region10: #{mini_deepsets_forward.1} parent=1 // pred_check
      _
    $region11: #{mini_deepsets_forward.1} parent=1 // pred_check_branch
      %22 = sbr.rel (0) target = $region13
    $region12: #{mini_deepsets_forward.1} parent=1 // pred_region
      _
    $region13: #{mini_deepsets_forward.1} parent=1 // pred_fallthru
      _
    // Predicated region
    $region14: #{mini_deepsets_forward.1} parent=1 // pred_check
      _
    $region15: #{mini_deepsets_forward.1} parent=1 // pred_check_branch
      %24 = sbr.rel (0) target = $region17
    $region16: #{mini_deepsets_forward.1} parent=1 // pred_region
      _
    $region17: #{mini_deepsets_forward.1} parent=1 // pred_fallthru
      _
    // Predicated region
    $region18: #{mini_deepsets_forward.1} parent=1 // pred_check
      _
    $region19: #{mini_deepsets_forward.1} parent=1 // pred_check_branch
      %26 = sbr.rel (0) target = $region21
    $region20: #{mini_deepsets_forward.1} parent=1 // pred_region
      _
    $region21: #{mini_deepsets_forward.1} parent=1 // pred_fallthru
      _
    // Predicated region
    $region22: #{mini_deepsets_forward.1} parent=1 // pred_check
      _
    $region23: #{mini_deepsets_forward.1} parent=1 // pred_check_branch
      %28 = sbr.rel (0) target = $region25
    $region24: #{mini_deepsets_forward.1} parent=1 // pred_region
      _
    $region25: #{mini_deepsets_forward.1} parent=1 // pred_fallthru
      _
    // Predicated region
    $region26: #{mini_deepsets_forward.1} parent=1 // pred_check
      _
    $region27: #{mini_deepsets_forward.1} parent=1 // pred_check_branch
      %30 = sbr.rel (0) target = $region29
    $region28: #{mini_deepsets_forward.1} parent=1 // pred_region
      %32 = vsyncadd [#allocation3], 0
      %s33 = sshll.u32 %s6, 4
      %s34 = int_to_ptr.hbm [resolvable:$true] %s33
      %s35 = sshll.u32 [#allocation2], 4
      %s36 = int_to_ptr.vmem [resolvable:$true] %s35
      %41 = dma.hbm_to_vmem [thread:$0]  %s34, 512, %s36, [#allocation3], 128, 128, 8
    $region29: #{mini_deepsets_forward.1} parent=1 // pred_fallthru
      _
    // Predicated region
    $region30: #{mini_deepsets_forward.1} parent=1 // pred_check
      _
    $region31: #{mini_deepsets_forward.1} parent=1 // pred_check_branch
      %43 = sbr.rel (0) target = $region33
    $region32: #{mini_deepsets_forward.1} parent=1 // pred_region
      _
    $region33: #{mini_deepsets_forward.1} parent=1 // pred_fallthru
      _
    // Predicated region
    $region34: #{mini_deepsets_forward.1} parent=1 // pred_check
      _
    $region35: #{mini_deepsets_forward.1} parent=1 // pred_check_branch
      %45 = sbr.rel (0) target = $region37
    $region36: #{mini_deepsets_forward.1} parent=1 // pred_region
      _
    $region37: #{mini_deepsets_forward.1} parent=1 // pred_fallthru
      _
    // Predicated region
    $region38: #{mini_deepsets_forward.1} parent=1 // pred_check
      _
    $region39: #{mini_deepsets_forward.1} parent=1 // pred_check_branch
      %47 = sbr.rel (0) target = $region41
    $region40: #{mini_deepsets_forward.1} parent=1 // pred_region
      _
    $region41: #{mini_deepsets_forward.1} parent=1 // pred_fallthru
      _
    // Predicated region
    $region42: #{mini_deepsets_forward.1} parent=1 // pred_check
      _
    $region43: #{mini_deepsets_forward.1} parent=1 // pred_check_branch
      %49 = sbr.rel (0) target = $region45
    $region44: #{mini_deepsets_forward.1} parent=1 // pred_region
      %51 = dma.done [#allocation3], 512
    $region45: #{mini_deepsets_forward.1} parent=1 // pred_fallthru
      _
    %v52 = vld [vmem:[%s0] sm:$0xff]
    %v53 = vld [vmem:[%s0 + $0x8] sm:$0xff]
    %v54 = vld [vmem:[%s2] sm:$0xf]
    %v55 = vld [vmem:[%s3] sm:$0x1]
    %v57 = vperm.slane %v55, 0
    %vm59 = vcmask 31744
    %v61 = vsel %vm59, %v52, 0
    %v64 = vsel %vm59, %v53, 0
    %vm66 = vcmask 1043456
    %v68 = vsel %vm66, %v54, 0
    %70 = vmatpush.msra.mxu0 0.0
    %71 = vmatpush.msra.mxu0 0.0
    %72 = vmatpush.msra.mxu0 0.0
    %73 = vmatpush.msra.mxu0 0.0
    %74 = vmatpush.msra.mxu0 0.0
    %75 = vmatpush.msra.mxu0 0.0
    %76 = vmatpush.msra.mxu0 0.0
    %77 = vmatpush.msra.mxu0 0.0
    %78 = vmatpush.msra.mxu0 0.0
    %79 = vmatpush.msra.mxu0 0.0
    %80 = vmatpush.msra.mxu0 0.0
    %81 = vmatpush.msra.mxu0 0.0
    %82 = vmatpush.msra.mxu0 0.0
    %83 = vmatpush.msra.mxu0 0.0
    %84 = vmatpush.msra.mxu0 0.0
    %85 = vmatpush.msra.mxu0 %v68
    %86 = vmatmul.f32.gmra.mxu0 %v61
    %v87 = vpop.f32.mrf.mxu0
    %v88 = vadd.f32 %v57, %v87
    %89 = vmatmul.f32.gmra.mxu0 %v64
    %v90 = vpop.f32.mrf.mxu0
    %v91 = vadd.f32 %v57, %v90
    %92 = vdwg.mxu0
    %v93 = vmax.f32 %v88, 0.0
    %v94 = vmax.f32 %v91, 0.0
    %v95 = vld [vmem:[%s4] sm:$0xff]
    %v96 = vld [vmem:[%s4 + $0x8] sm:$0xff]
    %v97 = vld [vmem:[%s4 + $0x10] sm:$0xff]
    %v98 = vld [vmem:[%s4 + $0x18] sm:$0xff]
    %v99 = vld [vmem:[%s5] sm:$0x1]
    %v101 = vperm.slane %v99, 0
    %vm103 = vcmask 261120
    %v105 = vsel %vm103, %v93, 0
    %v108 = vsel %vm103, %v94, 0
    %110 = vmatpush.msra.mxu0 0.0
    %111 = vmatpush.msra.mxu0 0.0
    %112 = vmatpush.msra.mxu0 0.0
    %113 = vmatpush.msra.mxu0 0.0
    %114 = vmatpush.msra.mxu0 0.0
    %115 = vmatpush.msra.mxu0 0.0
    %116 = vmatpush.msra.mxu0 0.0
    %117 = vmatpush.msra.mxu0 0.0
    %118 = vmatpush.msra.mxu0 0.0
    %119 = vmatpush.msra.mxu0 0.0
    %120 = vmatpush.msra.mxu0 0.0
    %121 = vmatpush.msra.mxu0 0.0
    %122 = vmatpush.msra.mxu0 %v98
    %123 = vmatpush.msra.mxu0 %v97
    %124 = vmatpush.msra.mxu0 %v96
    %125 = vmatpush.msra.mxu0 %v95
    %126 = vmatmul.f32.gmra.mxu0 %v105
    %v127 = vpop.f32.mrf.mxu0
    %v128 = vadd.f32 %v101, %v127
    %129 = vmatmul.f32.gmra.mxu0 %v108
    %v130 = vpop.f32.mrf.mxu0
    %v131 = vadd.f32 %v101, %v130
    %132 = vdwg.mxu0
    %v133 = vmax.f32 %v128, 0.0
    %v134 = vmax.f32 %v131, 0.0
    %v135 = vld [vmem:[#allocation2] sm:$0xff]
    %v136 = vld [vmem:[#allocation2 + $0x8] sm:$0xff]
    %v137 = vld [vmem:[#allocation2 + $0x10] sm:$0xff]
    %v138 = vld [vmem:[#allocation2 + $0x18] sm:$0xff]
    %v139 = vld [vmem:[%s7] sm:$0x1]
    %v141 = vperm.slane %v139, 0
    %v144 = vsel %vm103, %v133, 0
    %v147 = vsel %vm103, %v134, 0
    %149 = vmatpush.msra.mxu0 0.0
    %150 = vmatpush.msra.mxu0 0.0
    %151 = vmatpush.msra.mxu0 0.0
    %152 = vmatpush.msra.mxu0 0.0
    %153 = vmatpush.msra.mxu0 0.0
    %154 = vmatpush.msra.mxu0 0.0
    %155 = vmatpush.msra.mxu0 0.0
    %156 = vmatpush.msra.mxu0 0.0
    %157 = vmatpush.msra.mxu0 0.0
    %158 = vmatpush.msra.mxu0 0.0
    %159 = vmatpush.msra.mxu0 0.0
    %160 = vmatpush.msra.mxu0 0.0
    %161 = vmatpush.msra.mxu0 %v138
    %162 = vmatpush.msra.mxu0 %v137
    %163 = vmatpush.msra.mxu0 %v136
    %164 = vmatpush.msra.mxu0 %v135
    %165 = vmatmul.f32.gmra.mxu0 %v144
    %v166 = vpop.f32.mrf.mxu0
    %v167 = vadd.f32 %v141, %v166
    %168 = vmatmul.f32.gmra.mxu0 %v147
    %v169 = vpop.f32.mrf.mxu0
    %v170 = vadd.f32 %v141, %v169
    %171 = vdwg.mxu0
    %v172 = vmax.f32 %v167, 0.0
    %v173 = vmax.f32 %v170, 0.0
    %v174 = vld [vmem:[%s1] sm:$0x3]
    %vm175 = vcmask 130048
    %v177 = vsel %vm175, %v174, 0
    %179 = vmatpush.msra.mxu0 0.0
    %180 = vmatpush.msra.mxu0 0.0
    %181 = vmatpush.msra.mxu0 0.0
    %182 = vmatpush.msra.mxu0 0.0
    %183 = vmatpush.msra.mxu0 0.0
    %184 = vmatpush.msra.mxu0 0.0
    %185 = vmatpush.msra.mxu0 0.0
    %186 = vmatpush.msra.mxu0 0.0
    %187 = vmatpush.msra.mxu0 0.0
    %188 = vmatpush.msra.mxu0 0.0
    %189 = vmatpush.msra.mxu0 0.0
    %190 = vmatpush.msra.mxu0 0.0
    %191 = vmatpush.msra.mxu0 0.0
    %192 = vmatpush.msra.mxu0 0.0
    %193 = vmatpush.msra.mxu0 %v173
    %194 = vmatpush.msra.mxu0 %v172
    %195 = vmatmul.f32.gmra.mxu0 %v177
    %v196 = vpop.f32.mrf.mxu0
    %v197 = vadd.f32 0.0, %v196
    %198 = vdwg.mxu0
    %v199 = vld [vmem:[%s8] sm:$0xff]
    %v200 = vld [vmem:[%s8 + $0x8] sm:$0xff]
    %v201 = vld [vmem:[%s8 + $0x10] sm:$0xff]
    %v202 = vld [vmem:[%s8 + $0x18] sm:$0xff]
    %v203 = vld [vmem:[%s9] sm:$0x1]
    %v205 = vperm.slane %v203, 0
    %v208 = vsel %vm103, %v197, 0
    %210 = vmatpush.msra.mxu0 0.0
    %211 = vmatpush.msra.mxu0 0.0
    %212 = vmatpush.msra.mxu0 0.0
    %213 = vmatpush.msra.mxu0 0.0
    %214 = vmatpush.msra.mxu0 0.0
    %215 = vmatpush.msra.mxu0 0.0
    %216 = vmatpush.msra.mxu0 0.0
    %217 = vmatpush.msra.mxu0 0.0
    %218 = vmatpush.msra.mxu0 0.0
    %219 = vmatpush.msra.mxu0 0.0
    %220 = vmatpush.msra.mxu0 0.0
    %221 = vmatpush.msra.mxu0 0.0
    %222 = vmatpush.msra.mxu0 %v202
    %223 = vmatpush.msra.mxu0 %v201
    %224 = vmatpush.msra.mxu0 %v200
    %225 = vmatpush.msra.mxu0 %v199
    %226 = vmatmul.f32.gmra.mxu0 %v208
    %v227 = vpop.f32.mrf.mxu0
    %v228 = vadd.f32 %v205, %v227
    %229 = vdwg.mxu0
    %vm230 = vcmask 58368
    %231 = vst.msk [vmem:[#allocation5] sm:$0x3] %vm230, %v228
    // Predicated region
    $region46: #{mini_deepsets_forward.1} parent=1 // pred_check
      _
    $region47: #{mini_deepsets_forward.1} parent=1 // pred_check_branch
      %233 = sbr.rel (0) target = $region49
    $region48: #{mini_deepsets_forward.1} parent=1 // pred_region
      %235 = vsyncadd [#allocation4], 0
      %s237 = sshll.u32 [#allocation5], 4
      %s238 = int_to_ptr.vmem [resolvable:$true] %s237
      %s239 = sshll.u32 %s10, 4
      %s240 = int_to_ptr.hbm [resolvable:$true] %s239
      %242 = dma.vmem_to_hbm [thread:$0]  %s238, 32, %s240, [#allocation4]
    $region49: #{mini_deepsets_forward.1} parent=1 // pred_fallthru
      _
    // Predicated region
    $region50: #{mini_deepsets_forward.1} parent=1 // pred_check
      _
    $region51: #{mini_deepsets_forward.1} parent=1 // pred_check_branch
      %244 = sbr.rel (0) target = $region53
    $region52: #{mini_deepsets_forward.1} parent=1 // pred_region
      %246 = dma.done [#allocation4], 32
    $region53: #{mini_deepsets_forward.1} parent=1 // pred_fallthru
      _
    %247 = vsyncpa [#allocation3], 1
    %248 = vsyncpa [#allocation4], 1

</llo_original>
